<compile_context>
chip_gen: v5e
topology: v5e:2x2
jax: 0.10.0
libtpu: 0.0.40
codegen_flags: <defaults>
</compile_context>

<pallas_src>
import jax
import jax.numpy as jnp
from jax.experimental import pallas as pl
from jax.experimental.pallas import tpu as pltpu


def _transpose_kernel(x_ref, o_ref):
    # x_ref: (CB, TH, TW) tile in VMEM, o_ref: (CB, TW, TH) tile in VMEM.
    x = x_ref[...]
    y = None
    if hasattr(pltpu, "einshape"):
        try:
            # Lane-layout-aware minor-dim swap; preferred over jnp.swapaxes for
            # relayouts (lowers to XLU vxpose without intermediate VMEM copies).
            y = pltpu.einshape("chw->cwh", x)
        except Exception:
            y = None
    if y is None:
        y = jnp.swapaxes(x, -1, -2)
    o_ref[...] = y


def _choose_tile(dim, target):
    """Tile size for one spatial dim: the full dim if it fits, else a
    128-aligned cap <= target. Full-dim blocks are always legal (the (8,128)
    rule only constrains non-full blocks); partial edge blocks from the cdiv
    grid are handled by Pallas via read padding / masked writes."""
    if dim <= target:
        return int(dim)
    return int(max(128, (target // 128) * 128))


def transpose_last_two(
    x,
    *,
    tile_bytes_target=4 << 20,
    step_bytes_target=4 << 20,
    allow_xla_fallback=True,
):
    """Pallas equivalent of Transpose(0, 1, 3, 2): (B, C, H, W) -> (B, C, W, H)."""
    B, C, H, W = x.shape
    itemsize = jnp.dtype(x.dtype).itemsize
    total_bytes = B * C * H * W * itemsize

    # Narrow-H / tiny tensors: the output's last dim (H) < 128 forces masked
    # vst.msk stores at <= H/128 lane utilization, so a standalone relayout
    # kernel cannot reach the HBM roofline there. Leave those to XLA (or fuse
    # the transpose into the consumer) unless the Pallas path is forced.
    if allow_xla_fallback and (H < 128 or total_bytes < (4 << 20)):
        return jnp.swapaxes(x, -1, -2)

    LANE = 128  # TH and TW each become the lane dim of one of the two blocks,
                # so each must be a 128-multiple (or the full dim).
    tile_target = max(
        LANE, (int((tile_bytes_target / itemsize) ** 0.5) // LANE) * LANE
    )

    TH = _choose_tile(H, tile_target)
    TW = _choose_tile(W, tile_target)

    # Aggregate channels whenever a single (TH, TW) plane tile moves less than
    # the per-step traffic target, so each grid step keeps ~4 MiB in flight and
    # the fixed per-step grid overhead stays amortized.
    plane_tile_bytes = TH * TW * itemsize
    CB = int(min(C, max(1, -(-step_bytes_target // plane_tile_bytes))))

    # Innermost grid axis is the H-tile index so consecutive steps write
    # adjacent regions of the output's (lane) last dim.
    grid = (B, pl.cdiv(C, CB), pl.cdiv(W, TW), pl.cdiv(H, TH))

    # Explicit scoped-VMEM budget: double-buffered input + output tiles plus
    # headroom, clamped well under v7x's 64 MiB physical VMEM.
    tile_bytes = CB * TH * TW * itemsize
    vmem_limit = int(min(max(4 * tile_bytes + (8 << 20), 32 << 20), 48 << 20))

    out_shape = jax.ShapeDtypeStruct((B, C, W, H), x.dtype)

    return pl.pallas_call(
        _transpose_kernel,
        out_shape=out_shape,
        grid_spec=pltpu.PrefetchScalarGridSpec(
            num_scalar_prefetch=0,
            grid=grid,
            in_specs=[
                pl.BlockSpec(
                    (pl.Squeezed(), CB, TH, TW),
                    lambda b, c, w, h: (b, c, h, w),
                )
            ],
            out_specs=pl.BlockSpec(
                (pl.Squeezed(), CB, TW, TH),
                # Output tile (w, h) holds the transpose of input tile (h, w).
                lambda b, c, w, h: (b, c, w, h),
            ),
        ),
        compiler_params=pltpu.CompilerParams(
            dimension_semantics=("parallel",) * len(grid),
            vmem_limit_bytes=vmem_limit,
        ),
        cost_estimate=pl.CostEstimate(
            flops=0,
            transcendentals=0,
            bytes_accessed=2 * total_bytes,
        ),
    )(x)


if __name__ == "__main__":
    k0, k1, k2 = jax.random.split(jax.random.PRNGKey(0), 3)

    # 1) Small NCHW activation, forced through the Pallas path (channel
    #    aggregation, full-plane tiles) to verify kernel correctness.
    x = jax.random.normal(k0, (2, 4, 16, 32), dtype=jnp.float32)
    out = jax.block_until_ready(transpose_last_two(x, allow_xla_fallback=False))
    ref = jnp.transpose(x, (0, 1, 3, 2))
    assert out.shape == ref.shape, (out.shape, ref.shape)
    assert out.dtype == ref.dtype, (out.dtype, ref.dtype)
    assert jnp.array_equal(out, ref), "Pallas transpose mismatch (small-plane path)"

    # 2) Tiled path: H=1300 > 1024-tile -> cdiv grid with a partial edge block,
    #    plus CB>1 channel aggregation on the tiled path (natural dispatch).
    x2 = jax.random.normal(k1, (1, 4, 1300, 256), dtype=jnp.float32)
    out2 = jax.block_until_ready(transpose_last_two(x2))
    ref2 = jnp.transpose(x2, (0, 1, 3, 2))
    assert out2.shape == ref2.shape, (out2.shape, ref2.shape)
    assert jnp.array_equal(out2, ref2), "Pallas transpose mismatch (tiled/cdiv path)"

    # 3) Narrow-H dispatch path (left to XLA by design).
    x3 = jax.random.normal(k2, (2, 3, 8, 8), dtype=jnp.float32)
    out3 = jax.block_until_ready(transpose_last_two(x3))
    ref3 = jnp.transpose(x3, (0, 1, 3, 2))
    assert jnp.array_equal(out3, ref3), "XLA fallback path mismatch"

    print("KERNEL_OK")
</pallas_src>

<mosaic_0001>
module attributes {stable_mosaic.version = 11 : i64} {
  func.func @_transpose_kernel(%arg0: i32, %arg1: i32, %arg2: i32, %arg3: i32, %arg4: memref<1x4x16x32xf32, #tpu.memory_space<vmem>>, %arg5: memref<1x4x32x16xf32, #tpu.memory_space<vmem>>) attributes {dimension_semantics = [#tpu.dimension_semantics<parallel>, #tpu.dimension_semantics<parallel>, #tpu.dimension_semantics<parallel>, #tpu.dimension_semantics<parallel>], iteration_bounds = array<i64: 2, 1, 1, 1>, scalar_prefetch = 0 : i64, scratch_operands = 0 : i64, tpu.core_type = #tpu.core_type<tc>, window_params = [{transform_indices = @transform_0, window_bounds = array<i64: 1, 4, 16, 32>}, {transform_indices = @transform_1, window_bounds = array<i64: 1, 4, 32, 16>}]} {
    %c0 = arith.constant 0 : index
    %c0_0 = arith.constant 0 : index
    %c0_1 = arith.constant 0 : index
    %c0_2 = arith.constant 0 : index
    %0 = vector.load %arg4[%c0, %c0_0, %c0_1, %c0_2] : memref<1x4x16x32xf32, #tpu.memory_space<vmem>>, vector<1x4x16x32xf32>
    %1 = vector.shape_cast %0 : vector<1x4x16x32xf32> to vector<4x16x32xf32>
    %2 = tpu.transpose %1, [0, 2, 1] : vector<4x16x32xf32> -> vector<4x32x16xf32>
    %c0_3 = arith.constant 0 : index
    %c0_4 = arith.constant 0 : index
    %c0_5 = arith.constant 0 : index
    %c0_6 = arith.constant 0 : index
    %3 = vector.load %arg5[%c0_3, %c0_4, %c0_5, %c0_6] : memref<1x4x32x16xf32, #tpu.memory_space<vmem>>, vector<1x4x32x16xf32>
    %4 = vector.shape_cast %3 : vector<1x4x32x16xf32> to vector<4x32x16xf32>
    %5 = vector.shape_cast %2 : vector<4x32x16xf32> to vector<1x4x32x16xf32>
    tpu.vector_store %arg5[%c0_3, %c0_4, %c0_5, %c0_6], %5 {strides = array<i32>} : memref<1x4x32x16xf32, #tpu.memory_space<vmem>>, vector<1x4x32x16xf32>,
    return
  }
  func.func @transform_0(%arg0: i32, %arg1: i32, %arg2: i32, %arg3: i32) -> (i32, i32, i32, i32) {
    %c0_i32 = arith.constant 0 : i32
    return %arg0, %arg1, %arg3, %arg2 : i32, i32, i32, i32
  }
  func.func @transform_1(%arg0: i32, %arg1: i32, %arg2: i32, %arg3: i32) -> (i32, i32, i32, i32) {
    %c0_i32 = arith.constant 0 : i32
    return %arg0, %arg1, %arg2, %arg3 : i32, i32, i32, i32
  }
}

</mosaic_0001>

<llo_original>
// kernel: tpu_custom_call.1
$region0: #{tpu_custom_call.1}
  #allocation0 [shape = 'u32[]', space=smem, size = 0x4, offset = 0x4, fixed_abs, tag = 'smem constant byte address 0x4 - core index']
  #allocation1 [shape = 'u32[72,128]{1,0:T(1,128)}', space=vmem, size = 0x9000, scoped, tag = 'internal scratch']
  %s0 = inlined_call_operand.hbm [shape: f32[2,4,16,32], index: 0, kind: input, shape index: {}]
  %s1 = inlined_call_operand.vmem [shape: f32[2,4,32,16], index: 1, kind: output, shape index: {}]
  %s2 = sld [smem:[#allocation0]]
  $region41: #{tpu_custom_call.1} parent=0
    _
  %s4 = ssub.s32 1, %s2
  %s5 = scalar_select 0, %s4, %s2
  $region1: #{tpu_custom_call.1} parent=0
    #allocation2 [shape = 'u8[65536]{0}', space=vmem, size = 0x10000, scoped, tag = 'input window, operand 0']
    #allocation3 [shape = 's32[2]{0}', space=sflag, size = 0x8, scoped, tag = 'scoped memory for tpu_custom_call.1']
    %6 = vsyncpa [#allocation3], 0
    %s7 = scalar_lea.sflag [#allocation3], 1
    %8 = vsyncpa %s7, 0
    loop: start=0, step=1, limit=4
    $region2: #{tpu_custom_call.1} parent=1 // loop_pre_header
      _
    $region3: #{tpu_custom_call.1} parent=1 // loop_header
      %s10 = sphi 0, %s14
      %p11 = scmp.ge.s32.totalorder %s10, 4
      %s17 = sphi 0, %s43
      %s18 = sphi 0, %s39
      %s19 = sphi 0, %s35
      %s20 = sphi 0, %s31
      %s21 = sphi 0, %s17
      %s22 = sphi 0, %s18
      %s23 = sphi 0, %s19
      %s24 = sphi 0, %s20
      %s25 = sphi 0, %s21
      %s26 = sphi 0, %s22
      %s27 = sphi 0, %s23
      %s28 = sphi 0, %s24
      %s52 = sphi 0, %s54
      %s55 = sphi 0, %s52
      %s56 = sphi 0, %s55
      %s72 = sphi 0, %s56
      %s84 = sphi 0, %s86
      %s87 = sphi 0, %s84
      %s88 = sphi 0, %s87
      %s104 = sphi 0, %s88
    $region4: #{tpu_custom_call.1} parent=1 // loop_header_branch
      %13 = sbr.rel (%p11) target = $region8
    $region5: #{tpu_custom_call.1} parent=1 // loop_body
      %s15 = ssub.s32 %s10, 1
      %s16 = ssub.s32 %s10, 2
      %s29 = sadd.s32 1, %s20
      %p30 = scmp.ge.s32.totalorder %s29, 1
      %s31 = scalar_select %p30, 0, %s29
      %s32 = sadd.s32 1, %s19
      %s33 = scalar_select %p30, %s32, %s19
      %p34 = scmp.ge.s32.totalorder %s33, 1
      %s35 = scalar_select %p34, 0, %s33
      %s36 = sadd.s32 1, %s18
      %s37 = scalar_select %p34, %s36, %s18
      %p38 = scmp.ge.s32.totalorder %s37, 1
      %s39 = scalar_select %p38, 0, %s37
      %s40 = sadd.s32 1, %s17
      %s41 = scalar_select %p38, %s40, %s17
      %p42 = scmp.ge.s32.totalorder %s41, 2
      %s43 = scalar_select %p42, 0, %s41
      %s44 = ssub.s32 %s17, %s43
      %s45 = ssub.s32 %s18, %s39
      %s46 = sor.u32 %s44, %s45
      %s47 = ssub.s32 %s20, %s31
      %s48 = sor.u32 %s46, %s47
      %s49 = ssub.s32 %s19, %s35
      %s50 = sor.u32 %s48, %s49
      %p51 = scmp.eq.s32.totalorder %s50, 0
      %s53 = sadd.s32 %s52, 1
      %s54 = scalar_select %p51, %s52, %s53
      %p57 = pneg %p51
      %p58 = scmp.eq.s32.totalorder %s10, 1
      %p59 = por %p57, %p58
      %p60 = scmp.ne.s32.totalorder %s52, %s55
      %p61 = scmp.eq.s32.totalorder %s10, 0
      %p62 = por %p60, %p61
      %p63 = scmp.ne.s32.totalorder %s52, %s55
      %p64 = scmp.eq.s32.totalorder %s15, 1
      %p65 = por %p63, %p64
      %p66 = scmp.ne.s32.totalorder %s55, %s56
      %p67 = scmp.eq.s32.totalorder %s15, 0
      %p68 = por %p66, %p67
      %p69 = scmp.ne.s32.totalorder %s55, %s56
      %p70 = scmp.eq.s32.totalorder %s16, 1
      %p71 = por %p69, %p70
      %p73 = scmp.ne.s32.totalorder %s56, %s72
      %p74 = scmp.eq.s32.totalorder %s16, 0
      %p75 = por %p73, %p74
      %s76 = ssub.s32 %s17, %s43
      %s77 = ssub.s32 %s18, %s39
      %s78 = sor.u32 %s76, %s77
      %s79 = ssub.s32 %s19, %s35
      %s80 = sor.u32 %s78, %s79
      %s81 = ssub.s32 %s20, %s31
      %s82 = sor.u32 %s80, %s81
      %p83 = scmp.eq.s32.totalorder %s82, 0
      %s85 = sadd.s32 %s84, 1
      %s86 = scalar_select %p83, %s84, %s85
      %p89 = pneg %p83
      %p90 = scmp.eq.s32.totalorder %s10, 1
      %p91 = por %p89, %p90
      %p92 = scmp.ne.s32.totalorder %s84, %s87
      %p93 = scmp.eq.s32.totalorder %s10, 0
      %p94 = por %p92, %p93
      %p95 = scmp.ne.s32.totalorder %s84, %s87
      %p96 = scmp.eq.s32.totalorder %s15, 1
      %p97 = por %p95, %p96
      %p98 = scmp.ne.s32.totalorder %s87, %s88
      %p99 = scmp.eq.s32.totalorder %s15, 0
      %p100 = por %p98, %p99
      %p101 = scmp.ne.s32.totalorder %s87, %s88
      %p102 = scmp.eq.s32.totalorder %s16, 1
      %p103 = por %p101, %p102
      %p105 = scmp.ne.s32.totalorder %s88, %s104
      %p106 = scmp.eq.s32.totalorder %s16, 0
      %p107 = por %p105, %p106
      %p108 = scmp.le.s32.totalorder 1, %s10
      %p109 = scmp.lt.s32.totalorder %s10, 3
      %p110 = pnand %p108, %p109
      %p111 = pneg %p110
      // Predicated region
      $region9: #{tpu_custom_call.1} parent=5 // pred_check
        _
      $region10: #{tpu_custom_call.1} parent=5 // pred_check_branch
        %113 = sbr.rel (%p110) target = $region12
      $region11: #{tpu_custom_call.1} parent=5 // pred_region
        %s114 = ssub.s32 %s10, 1
      $region12: #{tpu_custom_call.1} parent=5 // pred_fallthru
        _
      %p115 = scmp.lt.s32.totalorder %s10, 2
      // Predicated region
      $region13: #{tpu_custom_call.1} parent=5 // pred_check
        %p116 = pneg %p115
      $region14: #{tpu_custom_call.1} parent=5 // pred_check_branch
        %118 = sbr.rel (%p116) target = $region16
      $region15: #{tpu_custom_call.1} parent=5 // pred_region
        // Predicated region
        $region17: #{tpu_custom_call.1} parent=15 // pred_check
          %p119 = pneg %p62
        $region18: #{tpu_custom_call.1} parent=15 // pred_check_branch
          %121 = sbr.rel (%p119) target = $region20
        $region19: #{tpu_custom_call.1} parent=15 // pred_region
          %s122 = sand.u32 %s52, 1
          %s123 = scalar_lea.sflag [#allocation3], %s122
          %s124 = sand.u32 %s52, 1
          %s125 = smul.addr %s124, 64
          %s126 = scalar_lea.vmem [#allocation2], %s125
          %s127 = smul.u32 4, %s18
          %s128 = smul.u32 2, %s20
          %130 = vsyncadd %s123, 0
          %s131 = sadd.s32 %s19, %s128
          %s132 = smul.addr %s127, 2
          %s133 = sadd.s32 %s131, %s132
          %s134 = smul.addr %s17, 8
          %s135 = sadd.s32 %s133, %s134
          %s136 = smul.addr %s135, 8
          %s137 = scalar_lea.hbm %s0, %s136
          %s138 = sshll.u32 %s137, 4
          %s139 = int_to_ptr.hbm [resolvable:$true] %s138
          %s140 = sshll.u32 %s126, 4
          %s141 = int_to_ptr.vmem [resolvable:$true] %s140
          %146 = dma.hbm_to_vmem [thread:$0]  %s139, 1024, %s141, %s123, 128, 128, 8
        $region20: #{tpu_custom_call.1} parent=15 // pred_fallthru
          _
      $region16: #{tpu_custom_call.1} parent=5 // pred_fallthru
        _
      %p147 = scmp.le.s32.totalorder 1, %s10
      %p148 = scmp.lt.s32.totalorder %s10, 3
      %p149 = pnand %p147, %p148
      %p150 = pneg %p149
      // Predicated region
      $region21: #{tpu_custom_call.1} parent=5 // pred_check
        _
      $region22: #{tpu_custom_call.1} parent=5 // pred_check_branch
        %152 = sbr.rel (%p149) target = $region24
      $region23: #{tpu_custom_call.1} parent=5 // pred_region
        %s153 = ssub.s32 %s10, 1
        %s154 = sand.u32 %s55, 1
        %s155 = scalar_lea.sflag [#allocation3], %s154
        %s156 = sand.u32 %s55, 1
        %s157 = smul.addr %s156, 64
        %s158 = scalar_lea.vmem [#allocation2], %s157
        // Predicated region
        $region25: #{tpu_custom_call.1} parent=23 // pred_check
          %p159 = pneg %p68
        $region26: #{tpu_custom_call.1} parent=23 // pred_check_branch
          %161 = sbr.rel (%p159) target = $region28
        $region27: #{tpu_custom_call.1} parent=23 // pred_region
          %163 = dma.done %s155, 1024
        $region28: #{tpu_custom_call.1} parent=23 // pred_fallthru
          _
        %s164 = sand.u32 %s55, 1
        %s165 = scalar_lea.sflag [#allocation3], %s164
        %s166 = sand.u32 %s55, 1
        %s167 = smul.addr %s166, 64
        %s168 = scalar_lea.vmem [#allocation2], %s167
        %p169 = pneg %p68
        %p170 = pneg %p65
        %p171 = pneg %p100
        %p172 = pneg %p97
        %s173 = smul.u32 4, %s22
        %s174 = smul.u32 4, %s23
        %p175 = scmp.lt.s32.totalorder %s21, 1
        %s176 = scalar_select %p175, %s21, 1
        %p177 = scmp.lt.s32.totalorder %s173, 3
        %s178 = scalar_select %p177, %s173, 3
        %p179 = scmp.lt.s32.totalorder %s174, 3
        %s180 = scalar_select %p179, %s174, 3
        %p181 = scmp.lt.s32.totalorder %s24, 0
        %s182 = scalar_select %p181, %s24, 0
        %s183 = sadd.s32 %s182, %s180
        %s184 = smul.addr %s178, 4
        %s185 = sadd.s32 %s183, %s184
        %s186 = smul.addr %s176, 16
        %s187 = sadd.s32 %s185, %s186
        %s188 = smul.addr %s187, 8
        %s189 = scalar_lea.vmem %s1, %s188
        %s190 = smul.u32 4, %s22
        %s191 = smul.u32 2, %s24
        %s192 = smul.u32 4, %s22
        %s193 = smul.u32 4, %s23
        %p194 = scmp.lt.s32.totalorder %s21, 1
        %s195 = scalar_select %p194, %s21, 1
        %p196 = scmp.lt.s32.totalorder %s192, 3
        %s197 = scalar_select %p196, %s192, 3
        %p198 = scmp.lt.s32.totalorder %s193, 3
        %s199 = scalar_select %p198, %s193, 3
        %p200 = scmp.lt.s32.totalorder %s24, 0
        %s201 = scalar_select %p200, %s24, 0
        %s202 = sadd.s32 %s201, %s199
        %s203 = smul.addr %s197, 4
        %s204 = sadd.s32 %s202, %s203
        %s205 = smul.addr %s195, 16
        %s206 = sadd.s32 %s204, %s205
        %s207 = smul.addr %s206, 8
        %s208 = scalar_lea.vmem %s1, %s207
        %s209 = smul.u32 4, %s22
        %s210 = smul.u32 4, %s23
        %v211 = vld [vmem:[%s158] sm:$0xff]
        %v212 = vld [vmem:[%s158 + $0x8] sm:$0xff]
        %v213 = vld [vmem:[%s158 + $0x10] sm:$0xff]
        %v214 = vld [vmem:[%s158 + $0x18] sm:$0xff]
        %v215 = vld [vmem:[%s158 + $0x20] sm:$0xff]
        %v216 = vld [vmem:[%s158 + $0x28] sm:$0xff]
        %v217 = vld [vmem:[%s158 + $0x30] sm:$0xff]
        %v218 = vld [vmem:[%s158 + $0x38] sm:$0xff]
        %219 = vxpose.xlu0.b32.start [1/16] %v211, 128
        %220 = vxpose.xlu0.b32.cont [2/16] %v212, 128
        %221 = vxpose.xlu0.b32.cont [3/16] 0.0, 128
        %222 = vxpose.xlu0.b32.cont [4/16] 0.0, 128
        %223 = vxpose.xlu0.b32.cont [5/16] 0.0, 128
        %224 = vxpose.xlu0.b32.cont [6/16] 0.0, 128
        %225 = vxpose.xlu0.b32.cont [7/16] 0.0, 128
        %226 = vxpose.xlu0.b32.cont [8/16] 0.0, 128
        %227 = vxpose.xlu0.b32.cont [9/16] 0.0, 128
        %228 = vxpose.xlu0.b32.cont [10/16] 0.0, 128
        %229 = vxpose.xlu0.b32.cont [11/16] 0.0, 128
        %230 = vxpose.xlu0.b32.cont [12/16] 0.0, 128
        %231 = vxpose.xlu0.b32.cont [13/16] 0.0, 128
        %232 = vxpose.xlu0.b32.cont [14/16] 0.0, 128
        %233 = vxpose.xlu0.b32.cont [15/16] 0.0, 128
        %234 = vxpose.xlu0.b32.end [16/16] 0.0, 128
        %v235 = vpop.trf.xlu0
        %v236 = vpop.trf.xlu0
        %v237 = vpop.trf.xlu0
        %v238 = vpop.trf.xlu0
        %v239 = vpop.trf.xlu0
        %v240 = vpop.trf.xlu0
        %v241 = vpop.trf.xlu0
        %v242 = vpop.trf.xlu0
        %v243 = vpop.trf.xlu0
        %v244 = vpop.trf.xlu0
        %v245 = vpop.trf.xlu0
        %v246 = vpop.trf.xlu0
        %v247 = vpop.trf.xlu0
        %v248 = vpop.trf.xlu0
        %v249 = vpop.trf.xlu0
        %v250 = vpop.trf.xlu0
        %251 = vxpose.xlu0.b32.start [1/16] %v213, 128
        %252 = vxpose.xlu0.b32.cont [2/16] %v214, 128
        %253 = vxpose.xlu0.b32.cont [3/16] 0.0, 128
        %254 = vxpose.xlu0.b32.cont [4/16] 0.0, 128
        %255 = vxpose.xlu0.b32.cont [5/16] 0.0, 128
        %256 = vxpose.xlu0.b32.cont [6/16] 0.0, 128
        %257 = vxpose.xlu0.b32.cont [7/16] 0.0, 128
        %258 = vxpose.xlu0.b32.cont [8/16] 0.0, 128
        %259 = vxpose.xlu0.b32.cont [9/16] 0.0, 128
        %260 = vxpose.xlu0.b32.cont [10/16] 0.0, 128
        %261 = vxpose.xlu0.b32.cont [11/16] 0.0, 128
        %262 = vxpose.xlu0.b32.cont [12/16] 0.0, 128
        %263 = vxpose.xlu0.b32.cont [13/16] 0.0, 128
        %264 = vxpose.xlu0.b32.cont [14/16] 0.0, 128
        %265 = vxpose.xlu0.b32.cont [15/16] 0.0, 128
        %266 = vxpose.xlu0.b32.end [16/16] 0.0, 128
        %v267 = vpop.trf.xlu0
        %v268 = vpop.trf.xlu0
        %v269 = vpop.trf.xlu0
        %v270 = vpop.trf.xlu0
        %v271 = vpop.trf.xlu0
        %v272 = vpop.trf.xlu0
        %v273 = vpop.trf.xlu0
        %v274 = vpop.trf.xlu0
        %v275 = vpop.trf.xlu0
        %v276 = vpop.trf.xlu0
        %v277 = vpop.trf.xlu0
        %v278 = vpop.trf.xlu0
        %v279 = vpop.trf.xlu0
        %v280 = vpop.trf.xlu0
        %v281 = vpop.trf.xlu0
        %v282 = vpop.trf.xlu0
        %283 = vxpose.xlu0.b32.start [1/16] %v215, 128
        %284 = vxpose.xlu0.b32.cont [2/16] %v216, 128
        %285 = vxpose.xlu0.b32.cont [3/16] 0.0, 128
        %286 = vxpose.xlu0.b32.cont [4/16] 0.0, 128
        %287 = vxpose.xlu0.b32.cont [5/16] 0.0, 128
        %288 = vxpose.xlu0.b32.cont [6/16] 0.0, 128
        %289 = vxpose.xlu0.b32.cont [7/16] 0.0, 128
        %290 = vxpose.xlu0.b32.cont [8/16] 0.0, 128
        %291 = vxpose.xlu0.b32.cont [9/16] 0.0, 128
        %292 = vxpose.xlu0.b32.cont [10/16] 0.0, 128
        %293 = vxpose.xlu0.b32.cont [11/16] 0.0, 128
        %294 = vxpose.xlu0.b32.cont [12/16] 0.0, 128
        %295 = vxpose.xlu0.b32.cont [13/16] 0.0, 128
        %296 = vxpose.xlu0.b32.cont [14/16] 0.0, 128
        %297 = vxpose.xlu0.b32.cont [15/16] 0.0, 128
        %298 = vxpose.xlu0.b32.end [16/16] 0.0, 128
        %v299 = vpop.trf.xlu0
        %v300 = vpop.trf.xlu0
        %v301 = vpop.trf.xlu0
        %v302 = vpop.trf.xlu0
        %v303 = vpop.trf.xlu0
        %v304 = vpop.trf.xlu0
        %v305 = vpop.trf.xlu0
        %v306 = vpop.trf.xlu0
        %v307 = vpop.trf.xlu0
        %v308 = vpop.trf.xlu0
        %v309 = vpop.trf.xlu0
        %v310 = vpop.trf.xlu0
        %v311 = vpop.trf.xlu0
        %v312 = vpop.trf.xlu0
        %v313 = vpop.trf.xlu0
        %v314 = vpop.trf.xlu0
        %315 = vxpose.xlu0.b32.start [1/16] %v217, 128
        %316 = vxpose.xlu0.b32.cont [2/16] %v218, 128
        %317 = vxpose.xlu0.b32.cont [3/16] 0.0, 128
        %318 = vxpose.xlu0.b32.cont [4/16] 0.0, 128
        %319 = vxpose.xlu0.b32.cont [5/16] 0.0, 128
        %320 = vxpose.xlu0.b32.cont [6/16] 0.0, 128
        %321 = vxpose.xlu0.b32.cont [7/16] 0.0, 128
        %322 = vxpose.xlu0.b32.cont [8/16] 0.0, 128
        %323 = vxpose.xlu0.b32.cont [9/16] 0.0, 128
        %324 = vxpose.xlu0.b32.cont [10/16] 0.0, 128
        %325 = vxpose.xlu0.b32.cont [11/16] 0.0, 128
        %326 = vxpose.xlu0.b32.cont [12/16] 0.0, 128
        %327 = vxpose.xlu0.b32.cont [13/16] 0.0, 128
        %328 = vxpose.xlu0.b32.cont [14/16] 0.0, 128
        %329 = vxpose.xlu0.b32.cont [15/16] 0.0, 128
        %330 = vxpose.xlu0.b32.end [16/16] 0.0, 128
        %v331 = vpop.trf.xlu0
        %v332 = vpop.trf.xlu0
        %v333 = vpop.trf.xlu0
        %v334 = vpop.trf.xlu0
        %v335 = vpop.trf.xlu0
        %v336 = vpop.trf.xlu0
        %v337 = vpop.trf.xlu0
        %v338 = vpop.trf.xlu0
        %v339 = vpop.trf.xlu0
        %v340 = vpop.trf.xlu0
        %v341 = vpop.trf.xlu0
        %v342 = vpop.trf.xlu0
        %v343 = vpop.trf.xlu0
        %v344 = vpop.trf.xlu0
        %v345 = vpop.trf.xlu0
        %v346 = vpop.trf.xlu0
        %vm347 = vcmask 130048
        %348 = vst.msk [vmem:[%s208] sm:$0xff] %vm347, %v235
        %349 = vst.msk [vmem:[%s208 + $0x8] sm:$0xff] %vm347, %v236
        %350 = vst.msk [vmem:[%s208 + $0x10] sm:$0xff] %vm347, %v237
        %351 = vst.msk [vmem:[%s208 + $0x18] sm:$0xff] %vm347, %v238
        %352 = vst.msk [vmem:[%s208 + $0x20] sm:$0xff] %vm347, %v267
        %353 = vst.msk [vmem:[%s208 + $0x28] sm:$0xff] %vm347, %v268
        %354 = vst.msk [vmem:[%s208 + $0x30] sm:$0xff] %vm347, %v269
        %355 = vst.msk [vmem:[%s208 + $0x38] sm:$0xff] %vm347, %v270
        %356 = vst.msk [vmem:[%s208 + $0x40] sm:$0xff] %vm347, %v299
        %357 = vst.msk [vmem:[%s208 + $0x48] sm:$0xff] %vm347, %v300
        %358 = vst.msk [vmem:[%s208 + $0x50] sm:$0xff] %vm347, %v301
        %359 = vst.msk [vmem:[%s208 + $0x58] sm:$0xff] %vm347, %v302
        %360 = vst.msk [vmem:[%s208 + $0x60] sm:$0xff] %vm347, %v331
        %361 = vst.msk [vmem:[%s208 + $0x68] sm:$0xff] %vm347, %v332
        %362 = vst.msk [vmem:[%s208 + $0x70] sm:$0xff] %vm347, %v333
        %363 = vst.msk [vmem:[%s208 + $0x78] sm:$0xff] %vm347, %v334
        %s364 = smul.u32 4, %s22
        %s365 = smul.u32 4, %s23
        %p366 = scmp.lt.s32.totalorder %s21, 1
        %s367 = scalar_select %p366, %s21, 1
        %p368 = scmp.lt.s32.totalorder %s364, 3
        %s369 = scalar_select %p368, %s364, 3
        %p370 = scmp.lt.s32.totalorder %s365, 3
        %s371 = scalar_select %p370, %s365, 3
        %p372 = scmp.lt.s32.totalorder %s24, 0
        %s373 = scalar_select %p372, %s24, 0
        %s374 = sadd.s32 %s373, %s371
        %s375 = smul.addr %s369, 4
        %s376 = sadd.s32 %s374, %s375
        %s377 = smul.addr %s367, 16
        %s378 = sadd.s32 %s376, %s377
        %s379 = smul.addr %s378, 8
        %s380 = scalar_lea.vmem %s1, %s379
        // Predicated region
        $region29: #{tpu_custom_call.1} parent=23 // pred_check
          %p381 = pneg %p97
        $region30: #{tpu_custom_call.1} parent=23 // pred_check_branch
          %383 = sbr.rel (%p381) target = $region32
        $region31: #{tpu_custom_call.1} parent=23 // pred_region
          %s384 = smul.u32 4, %s22
          %s385 = smul.u32 4, %s23
        $region32: #{tpu_custom_call.1} parent=23 // pred_fallthru
          _
      $region24: #{tpu_custom_call.1} parent=5 // pred_fallthru
        _
      %p386 = scmp.le.s32.totalorder 2, %s10
      // Predicated region
      $region33: #{tpu_custom_call.1} parent=5 // pred_check
        %p387 = pneg %p386
      $region34: #{tpu_custom_call.1} parent=5 // pred_check_branch
        %389 = sbr.rel (%p387) target = $region36
      $region35: #{tpu_custom_call.1} parent=5 // pred_region
        %s390 = ssub.s32 %s10, 2
        // Predicated region
        $region37: #{tpu_custom_call.1} parent=35 // pred_check
          %p391 = pneg %p103
        $region38: #{tpu_custom_call.1} parent=35 // pred_check_branch
          %393 = sbr.rel (%p391) target = $region40
        $region39: #{tpu_custom_call.1} parent=35 // pred_region
          %s394 = smul.u32 4, %s26
          %s395 = smul.u32 4, %s27
          %p396 = scmp.lt.s32.totalorder %s25, 1
          %s397 = scalar_select %p396, %s25, 1
          %p398 = scmp.lt.s32.totalorder %s394, 3
          %s399 = scalar_select %p398, %s394, 3
          %p400 = scmp.lt.s32.totalorder %s395, 3
          %s401 = scalar_select %p400, %s395, 3
          %p402 = scmp.lt.s32.totalorder %s28, 0
          %s403 = scalar_select %p402, %s28, 0
          %s404 = sadd.s32 %s403, %s401
          %s405 = smul.addr %s399, 4
          %s406 = sadd.s32 %s404, %s405
          %s407 = smul.addr %s397, 16
          %s408 = sadd.s32 %s406, %s407
          %s409 = smul.addr %s408, 8
          %s410 = scalar_lea.vmem %s1, %s409
        $region40: #{tpu_custom_call.1} parent=35 // pred_fallthru
          _
      $region36: #{tpu_custom_call.1} parent=5 // pred_fallthru
        _
    $region6: #{tpu_custom_call.1} parent=1 // loop_footer
      %s14 = sadd.s32 1, %s10
    $region7: #{tpu_custom_call.1} parent=1 // loop_footer_branch
      %9 = sbr.rel target = $region3
    $region8: #{tpu_custom_call.1} parent=1 // loop_exit
      _
    %411 = vsyncpa [#allocation3], 1
    %s412 = scalar_lea.sflag [#allocation3], 1
    %413 = vsyncpa %s412, 1

</llo_original>
